<compile_context>
chip_gen: v7x
topology: tpu7x:2x2x1
jax: 0.10.0
libtpu: 0.0.40
codegen_flags: <defaults>
</compile_context>

<pallas_src>
import functools

import jax
import jax.numpy as jnp
from jax.experimental import pallas as pl
from jax.experimental.pallas import tpu as pltpu

FP = 128  # lane-dense padded feature width


def gcn_block_kernel(a_ref, dis_ref, x_ref, w_ref, p_ref, o_ref, opad_ref,
                     *, f_true):
    """Fused GCNConv + LayerNorm + ReLU for one graph (one grid step).

    a_ref    : [N, N]   adjacency incl. self-loops (0/1), f32
    dis_ref  : [N, 1]   D^-1/2 per node, f32 (precomputed in XLA)
    x_ref    : [N, F]   node features, f32
    w_ref    : [F, FP]  W.T zero-padded on the lane dim, f32
    p_ref    : [8, FP]  row0=bias, row1=gamma, row2=beta, row3=lane mask
    o_ref    : [N, F]   true-width output
    opad_ref : [N, FP]  lane-dense padded output
    """
    inv_f = jnp.float32(1.0 / f_true)
    dis = dis_ref[...]                                         # [N, 1]

    # --- Aggregation on the narrow (F-lane) intermediate ---------------------
    #   D^-1/2 (A+I) D^-1/2 x  ==  dis * (A @ (dis * x))   (row scalings
    #   commute with the right-multiply by W.T)
    xs = dis * x_ref[...]                                      # [N, F]
    agg = dis * jnp.dot(a_ref[...], xs,
                        preferred_element_type=jnp.float32)    # [N, F]

    # --- Linear transform (MXU), lane-dense FP-wide result -------------------
    h = jnp.dot(agg, w_ref[...], preferred_element_type=jnp.float32)  # [N, FP]
    h = h + p_ref[0:1, :]                 # PyG GCNConv: bias AFTER aggregation

    # --- LayerNorm over the true feature dim (two-pass, pad lanes masked) ----
    mean = jnp.sum(h, axis=-1, keepdims=True) * inv_f          # pads are 0
    c = (h - mean) * p_ref[3:4, :]                             # mask pad lanes
    var = jnp.sum(c * c, axis=-1, keepdims=True) * inv_f
    hn = c * jax.lax.rsqrt(var + 1e-5)
    y = jnp.maximum(hn * p_ref[1:2, :] + p_ref[2:3, :], 0.0)   # gamma/beta+ReLU

    # --- Stores: full-width padded slab + true-F view (no XLA slice later) ---
    opad_ref[...] = y.astype(opad_ref.dtype)
    o_ref[...] = y[:, :f_true].astype(o_ref.dtype)


def _build_graph(edge_index, n):
    """O(E) XLA glue: dense 0/1 adjacency (+self loops) and D^-1/2.

    Assumes a simple graph (no duplicate edges / preexisting self-loops),
    matching the PyG GCNConv setup used by the module.
    """
    src, dst = edge_index[0], edge_index[1]
    a = jnp.zeros((n, n), jnp.float32).at[dst, src].set(1.0)
    diag = jnp.arange(n)
    a = a.at[diag, diag].set(1.0)                              # add self loops
    deg = jnp.zeros((n,), jnp.float32).at[dst].add(1.0) + 1.0  # in-degree + 1
    return a, jax.lax.rsqrt(deg)[:, None]


@jax.jit
def identity_operation_forward(x, edge_index, w, b, gamma, beta):
    """x: [B, N, F] (or [N, F]), edge_index: [B, 2, E] (or [2, E]).

    Returns (out, out_padded): out is [B, N, F]; out_padded is the lane-dense
    [B, N, 128] buffer (true features in [..., :F]) for downstream consumers.
    """
    single = x.ndim == 2
    if single:
        x, edge_index = x[None], edge_index[None]
    B, N, F = x.shape

    # Per-graph adjacency + degree normalization (out of the kernel).
    a, d_inv_sqrt = jax.vmap(lambda ei: _build_graph(ei, N))(edge_index)

    # Torch Linear weight is [out, in]; kernel computes agg @ W.T (lane-padded).
    w_k = jnp.zeros((F, FP), jnp.float32).at[:, :F].set(
        jnp.asarray(w, jnp.float32).T)

    # Fused parameter slab: bias / gamma / beta / lane-mask in one (8,128) DMA.
    params = jnp.zeros((8, FP), jnp.float32)
    params = params.at[0, :F].set(jnp.asarray(b, jnp.float32))
    params = params.at[1, :F].set(jnp.asarray(gamma, jnp.float32))
    params = params.at[2, :F].set(jnp.asarray(beta, jnp.float32))
    params = params.at[3, :F].set(1.0)

    kernel = functools.partial(gcn_block_kernel, f_true=F)

    out, out_pad = pl.pallas_call(
        kernel,
        out_shape=(jax.ShapeDtypeStruct((B, N, F), x.dtype),
                   jax.ShapeDtypeStruct((B, N, FP), x.dtype)),
        grid=(B,),
        in_specs=[
            pl.BlockSpec((pl.Squeezed(), N, N), lambda g: (g, 0, 0)),  # A
            pl.BlockSpec((pl.Squeezed(), N, 1), lambda g: (g, 0, 0)),  # D^-1/2
            pl.BlockSpec((pl.Squeezed(), N, F), lambda g: (g, 0, 0)),  # x
            pl.BlockSpec((F, FP), lambda g: (0, 0)),                   # W.T pad
            pl.BlockSpec((8, FP), lambda g: (0, 0)),                   # params
        ],
        out_specs=[
            pl.BlockSpec((pl.Squeezed(), N, F), lambda g: (g, 0, 0)),
            pl.BlockSpec((pl.Squeezed(), N, FP), lambda g: (g, 0, 0)),
        ],
        compiler_params=pltpu.CompilerParams(
            dimension_semantics=("parallel",)),
    )(a, d_inv_sqrt, x, w_k, params)

    if single:
        return out[0], out_pad[0]
    return out, out_pad


def _ref_forward(x, a01, w, b, gamma, beta):
    """Pure-JAX reference for one graph (same math, no Pallas)."""
    n = x.shape[0]
    A = jnp.maximum(a01, jnp.eye(n, dtype=jnp.float32))
    dis = jax.lax.rsqrt(jnp.sum(A, axis=1))
    A_hat = A * dis[:, None] * dis[None, :]
    h = A_hat @ (x @ w.T) + b[None, :]
    mu = jnp.mean(h, axis=-1, keepdims=True)
    va = jnp.mean((h - mu) ** 2, axis=-1, keepdims=True)
    return jnp.maximum((h - mu) * jax.lax.rsqrt(va + 1e-5) * gamma + beta, 0.0)


if __name__ == "__main__":
    B, N, F = 4, 16, 32  # graphs per call, nodes, hidden_dimension

    key = jax.random.PRNGKey(0)
    kx, kw, kb = jax.random.split(key, 3)

    x = jax.random.normal(kx, (B, N, F), dtype=jnp.float32)
    # torch convention: weight is [out_features, in_features]
    w = jax.random.normal(kw, (F, F), dtype=jnp.float32) * (1.0 / jnp.sqrt(F))
    b = jax.random.normal(kb, (F,), dtype=jnp.float32) * 0.01
    gamma = jnp.ones((F,), dtype=jnp.float32)
    beta = jnp.zeros((F,), dtype=jnp.float32)

    # Deterministic edge_index per graph: bidirectional "stride ring" graphs.
    idx = jnp.arange(N, dtype=jnp.int32)
    eis = []
    for g in range(B):
        nxt = (idx + g + 1) % N
        src = jnp.concatenate([idx, nxt])
        dst = jnp.concatenate([nxt, idx])
        eis.append(jnp.stack([src, dst], axis=0))
    edge_index = jnp.stack(eis, axis=0)                # [B, 2, 2N]

    out, out_pad = identity_operation_forward(x, edge_index, w, b, gamma, beta)
    jax.block_until_ready(out)
    assert out.shape == (B, N, F) and out.dtype == jnp.float32
    assert out_pad.shape == (B, N, FP)

    # Reference check (per graph, vmapped).
    a01 = jax.vmap(
        lambda ei: jnp.zeros((N, N), jnp.float32).at[ei[1], ei[0]].set(1.0)
    )(edge_index)
    ref = jax.vmap(_ref_forward, in_axes=(0, 0, None, None, None, None))(
        x, a01, w, b, gamma, beta)
    assert jnp.allclose(out, ref, atol=1e-4, rtol=1e-4)
    assert jnp.allclose(out_pad[..., :F], ref, atol=1e-4, rtol=1e-4)

    print("KERNEL_OK")
</pallas_src>

<mosaic_0001>
module attributes {stable_mosaic.version = 11 : i64} {
  func.func private @main(%arg0: i32) attributes {dimension_semantics = [#tpu.dimension_semantics<core_parallel>], iteration_bounds = array<i64: 2>, tpu.core_type = #tpu.core_type<sc_scalar_subcore>, window_params = []} {
    return
  }
}

module attributes {stable_mosaic.version = 11 : i64} {
  func.func private @main(%arg0: i32) attributes {dimension_semantics = [#tpu.dimension_semantics<core_parallel>], iteration_bounds = array<i64: 2>, tpu.core_type = #tpu.core_type<sc_scalar_subcore>, window_params = []} {
    return
  }
}

module attributes {stable_mosaic.version = 11 : i64} {
  func.func @gcn_block_kernel(%arg0: i32, %arg1: memref<1x16x16xf32, #tpu.memory_space<vmem>>, %arg2: memref<1x16x1xf32, #tpu.memory_space<vmem>>, %arg3: memref<1x16x32xf32, #tpu.memory_space<vmem>>, %arg4: memref<32x128xf32, #tpu.memory_space<vmem>>, %arg5: memref<8x128xf32, #tpu.memory_space<vmem>>, %arg6: memref<1x16x32xf32, #tpu.memory_space<vmem>>, %arg7: memref<1x16x128xf32, #tpu.memory_space<vmem>>) attributes {dimension_semantics = [#tpu.dimension_semantics<parallel>], iteration_bounds = array<i64: 4>, scalar_prefetch = 0 : i64, scratch_operands = 0 : i64, tpu.core_type = #tpu.core_type<tc>, window_params = [{transform_indices = @transform_0, window_bounds = array<i64: 1, 16, 16>}, {transform_indices = @transform_1, window_bounds = array<i64: 1, 16, 1>}, {transform_indices = @transform_2, window_bounds = array<i64: 1, 16, 32>}, {pipeline_mode = #tpu.pipeline_mode<synchronous>, transform_indices = @transform_3, window_bounds = array<i64: 32, 128>}, {pipeline_mode = #tpu.pipeline_mode<synchronous>, transform_indices = @transform_4, window_bounds = array<i64: 8, 128>}, {transform_indices = @transform_5, window_bounds = array<i64: 1, 16, 32>}, {transform_indices = @transform_6, window_bounds = array<i64: 1, 16, 128>}]} {
    %c0 = arith.constant 0 : index
    %c0_0 = arith.constant 0 : index
    %c0_1 = arith.constant 0 : index
    %0 = vector.load %arg2[%c0, %c0_0, %c0_1] : memref<1x16x1xf32, #tpu.memory_space<vmem>>, vector<1x16x1xf32>
    %1 = vector.shape_cast %0 : vector<1x16x1xf32> to vector<16x1xf32>
    %c0_2 = arith.constant 0 : index
    %c0_3 = arith.constant 0 : index
    %c0_4 = arith.constant 0 : index
    %2 = vector.load %arg3[%c0_2, %c0_3, %c0_4] : memref<1x16x32xf32, #tpu.memory_space<vmem>>, vector<1x16x32xf32>
    %3 = vector.shape_cast %2 : vector<1x16x32xf32> to vector<16x32xf32>
    %4 = vector.broadcast %1 : vector<16x1xf32> to vector<16x32xf32>
    %5 = arith.mulf %4, %3 : vector<16x32xf32>
    %c0_5 = arith.constant 0 : index
    %c0_6 = arith.constant 0 : index
    %c0_7 = arith.constant 0 : index
    %6 = vector.load %arg1[%c0_5, %c0_6, %c0_7] : memref<1x16x16xf32, #tpu.memory_space<vmem>>, vector<1x16x16xf32>
    %7 = vector.shape_cast %6 : vector<1x16x16xf32> to vector<16x16xf32>
    %cst = arith.constant dense<0.000000e+00> : vector<16x32xf32>
    %8 = tpu.matmul %7, %5, %cst {dimension_numbers = #tpu.dot_dimension_numbers<[1], [0], [0], [1], [0, 0, 1, 1], [], []>} : vector<16x16xf32>, vector<16x32xf32>, vector<16x32xf32> -> vector<16x32xf32>
    %9 = vector.broadcast %1 : vector<16x1xf32> to vector<16x32xf32>
    %10 = arith.mulf %9, %8 : vector<16x32xf32>
    %c0_8 = arith.constant 0 : index
    %c0_9 = arith.constant 0 : index
    %11 = vector.load %arg4[%c0_8, %c0_9] : memref<32x128xf32, #tpu.memory_space<vmem>>, vector<32x128xf32>
    %cst_10 = arith.constant dense<0.000000e+00> : vector<16x128xf32>
    %12 = tpu.matmul %10, %11, %cst_10 {dimension_numbers = #tpu.dot_dimension_numbers<[1], [0], [0], [1], [0, 0, 1, 1], [], []>} : vector<16x32xf32>, vector<32x128xf32>, vector<16x128xf32> -> vector<16x128xf32>
    %c0_11 = arith.constant 0 : index
    %c0_12 = arith.constant 0 : index
    %13 = vector.load %arg5[%c0_11, %c0_12] : memref<8x128xf32, #tpu.memory_space<vmem>>, vector<1x128xf32>
    %14 = vector.broadcast %13 : vector<1x128xf32> to vector<16x128xf32>
    %15 = arith.addf %12, %14 : vector<16x128xf32>
    %cst_13 = arith.constant dense<0.000000e+00> : vector<16xf32>
    %16 = vector.multi_reduction <add>, %15, %cst_13 [1] : vector<16x128xf32> to vector<16xf32>
    %17 = vector.shape_cast %16 : vector<16xf32> to vector<16x1xf32>
    %cst_14 = arith.constant 3.125000e-02 : f32
    %18 = vector.broadcast %cst_14 : f32 to vector<16x1xf32>
    %19 = arith.mulf %17, %18 : vector<16x1xf32>
    %20 = vector.broadcast %19 : vector<16x1xf32> to vector<16x128xf32>
    %21 = arith.subf %15, %20 : vector<16x128xf32>
    %c3 = arith.constant 3 : index
    %c0_15 = arith.constant 0 : index
    %22 = vector.load %arg5[%c3, %c0_15] : memref<8x128xf32, #tpu.memory_space<vmem>>, vector<1x128xf32>
    %23 = vector.broadcast %22 : vector<1x128xf32> to vector<16x128xf32>
    %24 = arith.mulf %21, %23 : vector<16x128xf32>
    %25 = arith.mulf %24, %24 : vector<16x128xf32>
    %cst_16 = arith.constant dense<0.000000e+00> : vector<16xf32>
    %26 = vector.multi_reduction <add>, %25, %cst_16 [1] : vector<16x128xf32> to vector<16xf32>
    %27 = vector.shape_cast %26 : vector<16xf32> to vector<16x1xf32>
    %cst_17 = arith.constant 3.125000e-02 : f32
    %28 = vector.broadcast %cst_17 : f32 to vector<16x1xf32>
    %29 = arith.mulf %27, %28 : vector<16x1xf32>
    %cst_18 = arith.constant 9.99999974E-6 : f32
    %30 = vector.broadcast %cst_18 : f32 to vector<16x1xf32>
    %31 = arith.addf %29, %30 : vector<16x1xf32>
    %32 = math.rsqrt %31 : vector<16x1xf32>
    %33 = vector.broadcast %32 : vector<16x1xf32> to vector<16x128xf32>
    %34 = arith.mulf %24, %33 : vector<16x128xf32>
    %c1 = arith.constant 1 : index
    %c0_19 = arith.constant 0 : index
    %35 = vector.load %arg5[%c1, %c0_19] : memref<8x128xf32, #tpu.memory_space<vmem>>, vector<1x128xf32>
    %36 = vector.broadcast %35 : vector<1x128xf32> to vector<16x128xf32>
    %37 = arith.mulf %34, %36 : vector<16x128xf32>
    %c2 = arith.constant 2 : index
    %c0_20 = arith.constant 0 : index
    %38 = vector.load %arg5[%c2, %c0_20] : memref<8x128xf32, #tpu.memory_space<vmem>>, vector<1x128xf32>
    %39 = vector.broadcast %38 : vector<1x128xf32> to vector<16x128xf32>
    %40 = arith.addf %37, %39 : vector<16x128xf32>
    %cst_21 = arith.constant 0.000000e+00 : f32
    %41 = vector.broadcast %cst_21 : f32 to vector<16x128xf32>
    %42 = arith.maximumf %40, %41 : vector<16x128xf32>
    %c0_22 = arith.constant 0 : index
    %c0_23 = arith.constant 0 : index
    %c0_24 = arith.constant 0 : index
    %43 = vector.load %arg7[%c0_22, %c0_23, %c0_24] : memref<1x16x128xf32, #tpu.memory_space<vmem>>, vector<1x16x128xf32>
    %44 = vector.shape_cast %43 : vector<1x16x128xf32> to vector<16x128xf32>
    %45 = vector.shape_cast %42 : vector<16x128xf32> to vector<1x16x128xf32>
    tpu.vector_store %arg7[%c0_22, %c0_23, %c0_24], %45 {strides = array<i32>} : memref<1x16x128xf32, #tpu.memory_space<vmem>>, vector<1x16x128xf32>,
    %46 = vector.extract_strided_slice %42 {offsets = [0, 0], sizes = [16, 32], strides = [1, 1]} : vector<16x128xf32> to vector<16x32xf32>
    %c0_25 = arith.constant 0 : index
    %c0_26 = arith.constant 0 : index
    %c0_27 = arith.constant 0 : index
    %47 = vector.load %arg6[%c0_25, %c0_26, %c0_27] : memref<1x16x32xf32, #tpu.memory_space<vmem>>, vector<1x16x32xf32>
    %48 = vector.shape_cast %47 : vector<1x16x32xf32> to vector<16x32xf32>
    %49 = vector.shape_cast %46 : vector<16x32xf32> to vector<1x16x32xf32>
    tpu.vector_store %arg6[%c0_25, %c0_26, %c0_27], %49 {strides = array<i32>} : memref<1x16x32xf32, #tpu.memory_space<vmem>>, vector<1x16x32xf32>,
    return
  }
  func.func @transform_0(%arg0: i32) -> (i32, i32, i32) {
    %c0_i32 = arith.constant 0 : i32
    %c0_i32_0 = arith.constant 0 : i32
    %c0_i32_1 = arith.constant 0 : i32
    return %arg0, %c0_i32, %c0_i32_0 : i32, i32, i32
  }
  func.func @transform_1(%arg0: i32) -> (i32, i32, i32) {
    %c0_i32 = arith.constant 0 : i32
    %c0_i32_0 = arith.constant 0 : i32
    %c0_i32_1 = arith.constant 0 : i32
    return %arg0, %c0_i32, %c0_i32_0 : i32, i32, i32
  }
  func.func @transform_2(%arg0: i32) -> (i32, i32, i32) {
    %c0_i32 = arith.constant 0 : i32
    %c0_i32_0 = arith.constant 0 : i32
    %c0_i32_1 = arith.constant 0 : i32
    return %arg0, %c0_i32, %c0_i32_0 : i32, i32, i32
  }
  func.func @transform_3(%arg0: i32) -> (i32, i32) {
    %c0_i32 = arith.constant 0 : i32
    %c0_i32_0 = arith.constant 0 : i32
    %c0_i32_1 = arith.constant 0 : i32
    return %c0_i32, %c0_i32_0 : i32, i32
  }
  func.func @transform_4(%arg0: i32) -> (i32, i32) {
    %c0_i32 = arith.constant 0 : i32
    %c0_i32_0 = arith.constant 0 : i32
    %c0_i32_1 = arith.constant 0 : i32
    return %c0_i32, %c0_i32_0 : i32, i32
  }
  func.func @transform_5(%arg0: i32) -> (i32, i32, i32) {
    %c0_i32 = arith.constant 0 : i32
    %c0_i32_0 = arith.constant 0 : i32
    %c0_i32_1 = arith.constant 0 : i32
    return %arg0, %c0_i32, %c0_i32_0 : i32, i32, i32
  }
  func.func @transform_6(%arg0: i32) -> (i32, i32, i32) {
    %c0_i32 = arith.constant 0 : i32
    %c0_i32_0 = arith.constant 0 : i32
    %c0_i32_1 = arith.constant 0 : i32
    return %arg0, %c0_i32, %c0_i32_0 : i32, i32, i32
  }
}

</mosaic_0001>

<llo_original>
// kernel: identity_operation_forward.1
$region0: #{identity_operation_forward.1}
  #allocation0 [shape = 'u32[]', space=smem, size = 0x4, offset = 0x4, fixed_abs, tag = 'smem constant byte address 0x4 - core index']
  #allocation1 [shape = 'u32[144,128]{1,0:T(1,128)}', space=vmem, size = 0x12000, scoped, tag = 'internal scratch']
  %s0 = inlined_call_operand.vmem [shape: f32[4,16,16], index: 0, kind: input, shape index: {}]
  %s1 = inlined_call_operand.vmem [shape: f32[4,16,1], index: 1, kind: input, shape index: {}]
  %s2 = inlined_call_operand.vmem [shape: f32[4,16,32], index: 2, kind: input, shape index: {}]
  %s3 = inlined_call_operand.vmem [shape: f32[32,128], index: 3, kind: input, shape index: {}]
  %s4 = inlined_call_operand.vmem [shape: f32[8,128], index: 4, kind: input, shape index: {}]
  %s5 = inlined_call_operand.hbm [shape: f32[4,16,32], index: 5, kind: output, shape index: {0}]
  %s6 = inlined_call_operand.hbm [shape: f32[4,16,128], index: 6, kind: output, shape index: {1}]
  %7 = xla_tuple %s5, %s6
  %s8 = sld [smem:[#allocation0]]
  $region61: #{identity_operation_forward.1} parent=0
    _
  %s10 = ssub.s32 1, %s8
  %s11 = scalar_select 0, %s10, %s8
  $region1: #{identity_operation_forward.1} parent=0
    #allocation2 [shape = 'u8[16384]{0}', space=vmem, size = 0x4000, scoped, tag = 'output window, operand 0']
    #allocation3 [shape = 's32[2]{0}', space=sflag, size = 0x8, scoped, tag = 'scoped memory for identity_operation_forward.1']
    #allocation4 [shape = 'u8[16384]{0}', space=vmem, size = 0x4000, scoped, tag = 'output window, operand 1']
    #allocation5 [shape = 's32[2]{0}', space=sflag, size = 0x8, scoped, tag = 'scoped memory for identity_operation_forward.1']
    %12 = vsyncpa [#allocation3], 0
    %s13 = scalar_lea.sflag [#allocation3], 1
    %14 = vsyncpa %s13, 0
    %15 = vsyncpa [#allocation5], 0
    %s16 = scalar_lea.sflag [#allocation5], 1
    %17 = vsyncpa %s16, 0
    loop: start=0, step=1, limit=6
    $region2: #{identity_operation_forward.1} parent=1 // loop_pre_header
      _
    $region3: #{identity_operation_forward.1} parent=1 // loop_header
      %s19 = sphi 0, %s23
      %p20 = scmp.ge.s32.totalorder %s19, 6
      %s29 = sphi 0, %s31
      %s32 = sphi 0, %s29
      %s33 = sphi 0, %s32
      %s49 = sphi 0, %s33
      %s55 = sphi 0, %s57
      %s58 = sphi 0, %s55
      %s59 = sphi 0, %s58
      %s75 = sphi 0, %s59
      %s81 = sphi 0, %s83
      %s84 = sphi 0, %s81
      %s85 = sphi 0, %s84
      %s101 = sphi 0, %s85
      %s105 = sphi 0, %s105
      %s107 = sphi 0, %s105
      %s108 = sphi 0, %s107
      %s122 = sphi 0, %s108
      %s126 = sphi 0, %s126
      %s128 = sphi 0, %s126
      %s129 = sphi 0, %s128
      %s143 = sphi 0, %s129
      %s149 = sphi 0, %s151
      %s152 = sphi 0, %s149
      %s153 = sphi 0, %s152
      %s169 = sphi 0, %s153
      %s175 = sphi 0, %s177
      %s178 = sphi 0, %s175
      %s179 = sphi 0, %s178
      %s195 = sphi 0, %s179
    $region4: #{identity_operation_forward.1} parent=1 // loop_header_branch
      %22 = sbr.rel (%p20) target = $region8
    $region5: #{identity_operation_forward.1} parent=1 // loop_body
      %s24 = ssub.s32 %s19, 1
      %s25 = ssub.s32 %s19, 2
      %s26 = sadd.s32 %s19, 1
      %s27 = ssub.s32 %s19, %s26
      %p28 = scmp.eq.s32.totalorder %s27, 0
      %s30 = sadd.s32 %s29, 1
      %s31 = scalar_select %p28, %s29, %s30
      %p34 = pneg %p28
      %p35 = scmp.eq.s32.totalorder %s19, 3
      %p36 = por %p34, %p35
      %p37 = scmp.ne.s32.totalorder %s29, %s32
      %p38 = scmp.eq.s32.totalorder %s19, 0
      %p39 = por %p37, %p38
      %p40 = scmp.ne.s32.totalorder %s29, %s32
      %p41 = scmp.eq.s32.totalorder %s24, 3
      %p42 = por %p40, %p41
      %p43 = scmp.ne.s32.totalorder %s32, %s33
      %p44 = scmp.eq.s32.totalorder %s24, 0
      %p45 = por %p43, %p44
      %p46 = scmp.ne.s32.totalorder %s32, %s33
      %p47 = scmp.eq.s32.totalorder %s25, 3
      %p48 = por %p46, %p47
      %p50 = scmp.ne.s32.totalorder %s33, %s49
      %p51 = scmp.eq.s32.totalorder %s25, 0
      %p52 = por %p50, %p51
      %s53 = ssub.s32 %s19, %s26
      %p54 = scmp.eq.s32.totalorder %s53, 0
      %s56 = sadd.s32 %s55, 1
      %s57 = scalar_select %p54, %s55, %s56
      %p60 = pneg %p54
      %p61 = scmp.eq.s32.totalorder %s19, 3
      %p62 = por %p60, %p61
      %p63 = scmp.ne.s32.totalorder %s55, %s58
      %p64 = scmp.eq.s32.totalorder %s19, 0
      %p65 = por %p63, %p64
      %p66 = scmp.ne.s32.totalorder %s55, %s58
      %p67 = scmp.eq.s32.totalorder %s24, 3
      %p68 = por %p66, %p67
      %p69 = scmp.ne.s32.totalorder %s58, %s59
      %p70 = scmp.eq.s32.totalorder %s24, 0
      %p71 = por %p69, %p70
      %p72 = scmp.ne.s32.totalorder %s58, %s59
      %p73 = scmp.eq.s32.totalorder %s25, 3
      %p74 = por %p72, %p73
      %p76 = scmp.ne.s32.totalorder %s59, %s75
      %p77 = scmp.eq.s32.totalorder %s25, 0
      %p78 = por %p76, %p77
      %s79 = ssub.s32 %s19, %s26
      %p80 = scmp.eq.s32.totalorder %s79, 0
      %s82 = sadd.s32 %s81, 1
      %s83 = scalar_select %p80, %s81, %s82
      %p86 = pneg %p80
      %p87 = scmp.eq.s32.totalorder %s19, 3
      %p88 = por %p86, %p87
      %p89 = scmp.ne.s32.totalorder %s81, %s84
      %p90 = scmp.eq.s32.totalorder %s19, 0
      %p91 = por %p89, %p90
      %p92 = scmp.ne.s32.totalorder %s81, %s84
      %p93 = scmp.eq.s32.totalorder %s24, 3
      %p94 = por %p92, %p93
      %p95 = scmp.ne.s32.totalorder %s84, %s85
      %p96 = scmp.eq.s32.totalorder %s24, 0
      %p97 = por %p95, %p96
      %p98 = scmp.ne.s32.totalorder %s84, %s85
      %p99 = scmp.eq.s32.totalorder %s25, 3
      %p100 = por %p98, %p99
      %p102 = scmp.ne.s32.totalorder %s85, %s101
      %p103 = scmp.eq.s32.totalorder %s25, 0
      %p104 = por %p102, %p103
      %s106 = sadd.s32 %s105, 1
      %p109 = scmp.eq.s32.totalorder %s19, 3
      %p110 = scmp.ne.s32.totalorder %s105, %s107
      %p111 = scmp.eq.s32.totalorder %s19, 0
      %p112 = por %p110, %p111
      %p113 = scmp.ne.s32.totalorder %s105, %s107
      %p114 = scmp.eq.s32.totalorder %s24, 3
      %p115 = por %p113, %p114
      %p116 = scmp.ne.s32.totalorder %s107, %s108
      %p117 = scmp.eq.s32.totalorder %s24, 0
      %p118 = por %p116, %p117
      %p119 = scmp.ne.s32.totalorder %s107, %s108
      %p120 = scmp.eq.s32.totalorder %s25, 3
      %p121 = por %p119, %p120
      %p123 = scmp.ne.s32.totalorder %s108, %s122
      %p124 = scmp.eq.s32.totalorder %s25, 0
      %p125 = por %p123, %p124
      %s127 = sadd.s32 %s126, 1
      %p130 = scmp.eq.s32.totalorder %s19, 3
      %p131 = scmp.ne.s32.totalorder %s126, %s128
      %p132 = scmp.eq.s32.totalorder %s19, 0
      %p133 = por %p131, %p132
      %p134 = scmp.ne.s32.totalorder %s126, %s128
      %p135 = scmp.eq.s32.totalorder %s24, 3
      %p136 = por %p134, %p135
      %p137 = scmp.ne.s32.totalorder %s128, %s129
      %p138 = scmp.eq.s32.totalorder %s24, 0
      %p139 = por %p137, %p138
      %p140 = scmp.ne.s32.totalorder %s128, %s129
      %p141 = scmp.eq.s32.totalorder %s25, 3
      %p142 = por %p140, %p141
      %p144 = scmp.ne.s32.totalorder %s129, %s143
      %p145 = scmp.eq.s32.totalorder %s25, 0
      %p146 = por %p144, %p145
      %s147 = ssub.s32 %s19, %s26
      %p148 = scmp.eq.s32.totalorder %s147, 0
      %s150 = sadd.s32 %s149, 1
      %s151 = scalar_select %p148, %s149, %s150
      %p154 = pneg %p148
      %p155 = scmp.eq.s32.totalorder %s19, 3
      %p156 = por %p154, %p155
      %p157 = scmp.ne.s32.totalorder %s149, %s152
      %p158 = scmp.eq.s32.totalorder %s19, 0
      %p159 = por %p157, %p158
      %p160 = scmp.ne.s32.totalorder %s149, %s152
      %p161 = scmp.eq.s32.totalorder %s24, 3
      %p162 = por %p160, %p161
      %p163 = scmp.ne.s32.totalorder %s152, %s153
      %p164 = scmp.eq.s32.totalorder %s24, 0
      %p165 = por %p163, %p164
      %p166 = scmp.ne.s32.totalorder %s152, %s153
      %p167 = scmp.eq.s32.totalorder %s25, 3
      %p168 = por %p166, %p167
      %p170 = scmp.ne.s32.totalorder %s153, %s169
      %p171 = scmp.eq.s32.totalorder %s25, 0
      %p172 = por %p170, %p171
      %s173 = ssub.s32 %s19, %s26
      %p174 = scmp.eq.s32.totalorder %s173, 0
      %s176 = sadd.s32 %s175, 1
      %s177 = scalar_select %p174, %s175, %s176
      %p180 = pneg %p174
      %p181 = scmp.eq.s32.totalorder %s19, 3
      %p182 = por %p180, %p181
      %p183 = scmp.ne.s32.totalorder %s175, %s178
      %p184 = scmp.eq.s32.totalorder %s19, 0
      %p185 = por %p183, %p184
      %p186 = scmp.ne.s32.totalorder %s175, %s178
      %p187 = scmp.eq.s32.totalorder %s24, 3
      %p188 = por %p186, %p187
      %p189 = scmp.ne.s32.totalorder %s178, %s179
      %p190 = scmp.eq.s32.totalorder %s24, 0
      %p191 = por %p189, %p190
      %p192 = scmp.ne.s32.totalorder %s178, %s179
      %p193 = scmp.eq.s32.totalorder %s25, 3
      %p194 = por %p192, %p193
      %p196 = scmp.ne.s32.totalorder %s179, %s195
      %p197 = scmp.eq.s32.totalorder %s25, 0
      %p198 = por %p196, %p197
      %p199 = scmp.le.s32.totalorder 1, %s19
      %p200 = scmp.lt.s32.totalorder %s19, 5
      %p201 = pnand %p199, %p200
      %p202 = pneg %p201
      // Predicated region
      $region9: #{identity_operation_forward.1} parent=5 // pred_check
        _
      $region10: #{identity_operation_forward.1} parent=5 // pred_check_branch
        %204 = sbr.rel (%p201) target = $region12
      $region11: #{identity_operation_forward.1} parent=5 // pred_region
        %s205 = ssub.s32 %s19, 1
        // Predicated region
        $region13: #{identity_operation_forward.1} parent=11 // pred_check
          %p206 = pneg %p118
        $region14: #{identity_operation_forward.1} parent=11 // pred_check_branch
          %208 = sbr.rel (%p206) target = $region16
        $region15: #{identity_operation_forward.1} parent=11 // pred_region
          _
        $region16: #{identity_operation_forward.1} parent=11 // pred_fallthru
          _
        // Predicated region
        $region17: #{identity_operation_forward.1} parent=11 // pred_check
          %p209 = pneg %p139
        $region18: #{identity_operation_forward.1} parent=11 // pred_check_branch
          %211 = sbr.rel (%p209) target = $region20
        $region19: #{identity_operation_forward.1} parent=11 // pred_region
          _
        $region20: #{identity_operation_forward.1} parent=11 // pred_fallthru
          _
      $region12: #{identity_operation_forward.1} parent=5 // pred_fallthru
        _
      %p212 = scmp.lt.s32.totalorder %s19, 4
      // Predicated region
      $region21: #{identity_operation_forward.1} parent=5 // pred_check
        %p213 = pneg %p212
      $region22: #{identity_operation_forward.1} parent=5 // pred_check_branch
        %215 = sbr.rel (%p213) target = $region24
      $region23: #{identity_operation_forward.1} parent=5 // pred_region
        // Predicated region
        $region25: #{identity_operation_forward.1} parent=23 // pred_check
          %p216 = pneg %p39
        $region26: #{identity_operation_forward.1} parent=23 // pred_check_branch
          %218 = sbr.rel (%p216) target = $region28
        $region27: #{identity_operation_forward.1} parent=23 // pred_region
          %p219 = scmp.lt.s32.totalorder %s19, 3
          %s220 = scalar_select %p219, %s19, 3
          %s221 = smul.addr %s220, 2
          %s222 = smul.addr %s221, 8
          %s223 = scalar_lea.vmem %s0, %s222
        $region28: #{identity_operation_forward.1} parent=23 // pred_fallthru
          _
        // Predicated region
        $region29: #{identity_operation_forward.1} parent=23 // pred_check
          %p224 = pneg %p65
        $region30: #{identity_operation_forward.1} parent=23 // pred_check_branch
          %226 = sbr.rel (%p224) target = $region32
        $region31: #{identity_operation_forward.1} parent=23 // pred_region
          %p227 = scmp.lt.s32.totalorder %s19, 3
          %s228 = scalar_select %p227, %s19, 3
          %s229 = smul.addr %s228, 2
          %s230 = smul.addr %s229, 8
          %s231 = scalar_lea.vmem %s1, %s230
        $region32: #{identity_operation_forward.1} parent=23 // pred_fallthru
          _
        // Predicated region
        $region33: #{identity_operation_forward.1} parent=23 // pred_check
          %p232 = pneg %p91
        $region34: #{identity_operation_forward.1} parent=23 // pred_check_branch
          %234 = sbr.rel (%p232) target = $region36
        $region35: #{identity_operation_forward.1} parent=23 // pred_region
          %p235 = scmp.lt.s32.totalorder %s19, 3
          %s236 = scalar_select %p235, %s19, 3
          %s237 = smul.addr %s236, 2
          %s238 = smul.addr %s237, 8
          %s239 = scalar_lea.vmem %s2, %s238
        $region36: #{identity_operation_forward.1} parent=23 // pred_fallthru
          _
      $region24: #{identity_operation_forward.1} parent=5 // pred_fallthru
        _
      %p240 = scmp.le.s32.totalorder 1, %s19
      %p241 = scmp.lt.s32.totalorder %s19, 5
      %p242 = pnand %p240, %p241
      %p243 = pneg %p242
      // Predicated region
      $region37: #{identity_operation_forward.1} parent=5 // pred_check
        _
      $region38: #{identity_operation_forward.1} parent=5 // pred_check_branch
        %245 = sbr.rel (%p242) target = $region40
      $region39: #{identity_operation_forward.1} parent=5 // pred_region
        %s246 = ssub.s32 %s19, 1
        %p247 = scmp.lt.s32.totalorder %s24, 3
        %s248 = scalar_select %p247, %s24, 3
        %s249 = smul.addr %s248, 2
        %s250 = smul.addr %s249, 8
        %s251 = scalar_lea.vmem %s0, %s250
        %p252 = pneg %p45
        %p253 = pneg %p42
        %p254 = scmp.lt.s32.totalorder %s24, 3
        %s255 = scalar_select %p254, %s24, 3
        %s256 = smul.addr %s255, 2
        %s257 = smul.addr %s256, 8
        %s258 = scalar_lea.vmem %s1, %s257
        %p259 = pneg %p71
        %p260 = pneg %p68
        %p261 = scmp.lt.s32.totalorder %s24, 3
        %s262 = scalar_select %p261, %s24, 3
        %s263 = smul.addr %s262, 2
        %s264 = smul.addr %s263, 8
        %s265 = scalar_lea.vmem %s2, %s264
        %p266 = pneg %p97
        %p267 = pneg %p94
        %p268 = pneg %p118
        %p269 = pneg %p115
        %p270 = pneg %p139
        %p271 = pneg %p136
        %p272 = pneg %p165
        %p273 = pneg %p162
        %s274 = sand.u32 %s152, 1
        %s275 = scalar_lea.sflag [#allocation3], %s274
        %s276 = sand.u32 %s152, 1
        %s277 = smul.addr %s276, 16
        %s278 = scalar_lea.vmem [#allocation2], %s277
        %p279 = pneg %p191
        %p280 = pneg %p188
        %s281 = sand.u32 %s178, 1
        %s282 = scalar_lea.sflag [#allocation5], %s281
        %s283 = sand.u32 %s178, 1
        %s284 = smul.addr %s283, 16
        %s285 = scalar_lea.vmem [#allocation4], %s284
        %p286 = scmp.lt.s32.totalorder %s24, 3
        %s287 = scalar_select %p286, %s24, 3
        %s288 = smul.addr %s287, 2
        %s289 = smul.addr %s288, 8
        %s290 = scalar_lea.vmem %s0, %s289
        %p291 = scmp.lt.s32.totalorder %s24, 3
        %s292 = scalar_select %p291, %s24, 3
        %s293 = smul.addr %s292, 2
        %s294 = smul.addr %s293, 8
        %s295 = scalar_lea.vmem %s1, %s294
        %p296 = scmp.lt.s32.totalorder %s24, 3
        %s297 = scalar_select %p296, %s24, 3
        %s298 = smul.addr %s297, 2
        %s299 = smul.addr %s298, 8
        %s300 = scalar_lea.vmem %s2, %s299
        %v301 = vld [vmem:[%s295] sm:$0xff]
        %v302 = vld [vmem:[%s295 + $0x8] sm:$0xff]
        %v303 = vld [vmem:[%s300] sm:$0xff]
        %v304 = vld [vmem:[%s300 + $0x8] sm:$0xff]
        %306 = vset.pattern.permute.xlu0 0
        %307 = vperm.xlu0 %306, %v301
        %v308 = vpop.permute.xlu0 %307
        %311 = vset.pattern.permute.xlu0 0
        %312 = vperm.xlu0 %311, %v302
        %v313 = vpop.permute.xlu0 %312
        %v315 = vmul.f32 %v308, %v303
        %v316 = vmul.f32 %v313, %v304
        %v317 = vld [vmem:[%s290] sm:$0xff]
        %v318 = vld [vmem:[%s290 + $0x8] sm:$0xff]
        %vm319 = vcmask 130048
        %v321 = vsel %vm319, %v317, 0
        %v324 = vsel %vm319, %v318, 0
        %326 = vmatprep.subr.mxu0 0.0
        %327 = vmatpush1.msra.mxu0 %v315
        %328 = vmatprep.subr.mxu0 0.0
        %329 = vmatpush1.msra.mxu0 %v316
        %330 = vmatprep.subr.mxu0 0.0
        %331 = vmatpush1.msra.mxu0 0.0
        %332 = vmatprep.subr.mxu0 0.0
        %333 = vmatpush1.msra.mxu0 0.0
        %334 = vmatprep.subr.mxu0 0.0
        %335 = vmatpush1.msra.mxu0 0.0
        %336 = vmatprep.subr.mxu0 0.0
        %337 = vmatpush1.msra.mxu0 0.0
        %338 = vmatprep.subr.mxu0 0.0
        %339 = vmatpush1.msra.mxu0 0.0
        %340 = vmatprep.subr.mxu0 0.0
        %341 = vmatpush1.msra.mxu0 0.0
        %342 = vmatprep.subr.mxu0 0.0
        %343 = vmatpush1.msra.mxu0 0.0
        %344 = vmatprep.subr.mxu0 0.0
        %345 = vmatpush1.msra.mxu0 0.0
        %346 = vmatprep.subr.mxu0 0.0
        %347 = vmatpush1.msra.mxu0 0.0
        %348 = vmatprep.subr.mxu0 0.0
        %349 = vmatpush1.msra.mxu0 0.0
        %350 = vmatprep.subr.mxu0 0.0
        %351 = vmatpush1.msra.mxu0 0.0
        %352 = vmatprep.subr.mxu0 0.0
        %353 = vmatpush1.msra.mxu0 0.0
        %354 = vmatprep.subr.mxu0 0.0
        %355 = vmatpush1.msra.mxu0 0.0
        %356 = vmatprep.subr.mxu0 0.0
        %357 = vmatpush1.msra.mxu0 0.0
        %358 = vmatprep.subr.mxu0 0.0
        %359 = vmatpush1.msra.mxu0 0.0
        %360 = vmatprep.subr.mxu0 0.0
        %361 = vmatpush1.msra.mxu0 0.0
        %362 = vmatprep.subr.mxu0 0.0
        %363 = vmatpush1.msra.mxu0 0.0
        %364 = vmatprep.subr.mxu0 0.0
        %365 = vmatpush1.msra.mxu0 0.0
        %366 = vmatprep.subr.mxu0 0.0
        %367 = vmatpush1.msra.mxu0 0.0
        %368 = vmatprep.subr.mxu0 0.0
        %369 = vmatpush1.msra.mxu0 0.0
        %370 = vmatprep.subr.mxu0 0.0
        %371 = vmatpush1.msra.mxu0 0.0
        %372 = vmatprep.subr.mxu0 0.0
        %373 = vmatpush1.msra.mxu0 0.0
        %374 = vmatprep.subr.mxu0 0.0
        %375 = vmatpush1.msra.mxu0 0.0
        %376 = vmatprep.subr.mxu0 0.0
        %377 = vmatpush1.msra.mxu0 0.0
        %378 = vmatprep.subr.mxu0 0.0
        %379 = vmatpush1.msra.mxu0 0.0
        %380 = vmatprep.subr.mxu0 0.0
        %381 = vmatpush1.msra.mxu0 0.0
        %382 = vmatprep.subr.mxu0 0.0
        %383 = vmatpush1.msra.mxu0 0.0
        %384 = vmatprep.subr.mxu0 0.0
        %385 = vmatpush1.msra.mxu0 0.0
        %386 = vmatprep.subr.mxu0 0.0
        %387 = vmatpush1.msra.mxu0 0.0
        %388 = vmatprep.subr.mxu0 0.0
        %389 = vmatpush1.msra.mxu0 0.0
        %390 = vmatprep.mubr.f32.mxu0 0.0
        %391 = vmatmul.mubr.f32.gmra.mrb[0].mxu0 %v321
        %v392 = vpop.f32.mrb[0].mxu0
        %v393 = vadd.f32 0.0, %v392
        %v394 = vpop.f32.mrb[0].mxu0
        %395 = vmatprep.mubr.f32.mxu0 0.0
        %396 = vmatmul.mubr.f32.gmra.mrb[0].mxu0 %v324
        %v397 = vpop.f32.mrb[0].mxu0
        %v398 = vadd.f32 0.0, %v397
        %v399 = vpop.f32.mrb[0].mxu0
        %400 = vdwg.mxu0
        %v401 = vmul.f32 %v308, %v393
        %v402 = vmul.f32 %v313, %v398
        %v403 = vld [vmem:[%s3] sm:$0xff]
        %v404 = vld [vmem:[%s3 + $0x8] sm:$0xff]
        %v405 = vld [vmem:[%s3 + $0x10] sm:$0xff]
        %v406 = vld [vmem:[%s3 + $0x18] sm:$0xff]
        %v407 = vld [vmem:[%s4] sm:$0x1]
        %v408 = vlaneseq
        %v409 = vshrl.u32 %v408, 7
        %v410 = vsub.s32 0, %v409
        %v411 = vrot.slane %v407, %v410
        %vm412 = vcmask 261120
        %v414 = vsel %vm412, %v401, 0
        %v417 = vsel %vm412, %v402, 0
        %419 = vmatprep.subr.mxu0 0.0
        %420 = vmatpush1.msra.mxu0 %v403
        %421 = vmatprep.subr.mxu0 0.0
        %422 = vmatpush1.msra.mxu0 %v404
        %423 = vmatprep.subr.mxu0 0.0
        %424 = vmatpush1.msra.mxu0 %v405
        %425 = vmatprep.subr.mxu0 0.0
        %426 = vmatpush1.msra.mxu0 %v406
        %427 = vmatprep.subr.mxu0 0.0
        %428 = vmatpush1.msra.mxu0 0.0
        %429 = vmatprep.subr.mxu0 0.0
        %430 = vmatpush1.msra.mxu0 0.0
        %431 = vmatprep.subr.mxu0 0.0
        %432 = vmatpush1.msra.mxu0 0.0
        %433 = vmatprep.subr.mxu0 0.0
        %434 = vmatpush1.msra.mxu0 0.0
        %435 = vmatprep.subr.mxu0 0.0
        %436 = vmatpush1.msra.mxu0 0.0
        %437 = vmatprep.subr.mxu0 0.0
        %438 = vmatpush1.msra.mxu0 0.0
        %439 = vmatprep.subr.mxu0 0.0
        %440 = vmatpush1.msra.mxu0 0.0
        %441 = vmatprep.subr.mxu0 0.0
        %442 = vmatpush1.msra.mxu0 0.0
        %443 = vmatprep.subr.mxu0 0.0
        %444 = vmatpush1.msra.mxu0 0.0
        %445 = vmatprep.subr.mxu0 0.0
        %446 = vmatpush1.msra.mxu0 0.0
        %447 = vmatprep.subr.mxu0 0.0
        %448 = vmatpush1.msra.mxu0 0.0
        %449 = vmatprep.subr.mxu0 0.0
        %450 = vmatpush1.msra.mxu0 0.0
        %451 = vmatprep.subr.mxu0 0.0
        %452 = vmatpush1.msra.mxu0 0.0
        %453 = vmatprep.subr.mxu0 0.0
        %454 = vmatpush1.msra.mxu0 0.0
        %455 = vmatprep.subr.mxu0 0.0
        %456 = vmatpush1.msra.mxu0 0.0
        %457 = vmatprep.subr.mxu0 0.0
        %458 = vmatpush1.msra.mxu0 0.0
        %459 = vmatprep.subr.mxu0 0.0
        %460 = vmatpush1.msra.mxu0 0.0
        %461 = vmatprep.subr.mxu0 0.0
        %462 = vmatpush1.msra.mxu0 0.0
        %463 = vmatprep.subr.mxu0 0.0
        %464 = vmatpush1.msra.mxu0 0.0
        %465 = vmatprep.subr.mxu0 0.0
        %466 = vmatpush1.msra.mxu0 0.0
        %467 = vmatprep.subr.mxu0 0.0
        %468 = vmatpush1.msra.mxu0 0.0
        %469 = vmatprep.subr.mxu0 0.0
        %470 = vmatpush1.msra.mxu0 0.0
        %471 = vmatprep.subr.mxu0 0.0
        %472 = vmatpush1.msra.mxu0 0.0
        %473 = vmatprep.subr.mxu0 0.0
        %474 = vmatpush1.msra.mxu0 0.0
        %475 = vmatprep.subr.mxu0 0.0
        %476 = vmatpush1.msra.mxu0 0.0
        %477 = vmatprep.subr.mxu0 0.0
        %478 = vmatpush1.msra.mxu0 0.0
        %479 = vmatprep.subr.mxu0 0.0
        %480 = vmatpush1.msra.mxu0 0.0
        %481 = vmatprep.subr.mxu0 0.0
        %482 = vmatpush1.msra.mxu0 0.0
        %483 = vmatprep.mubr.f32.mxu0 0.0
        %484 = vmatmul.mubr.f32.gmra.mrb[0].mxu0 %v414
        %v485 = vpop.f32.mrb[0].mxu0
        %v486 = vadd.f32 %v411, %v485
        %v487 = vpop.f32.mrb[0].mxu0
        %488 = vmatprep.mubr.f32.mxu0 0.0
        %489 = vmatmul.mubr.f32.gmra.mrb[0].mxu0 %v417
        %v490 = vpop.f32.mrb[0].mxu0
        %v491 = vadd.f32 %v411, %v490
        %v492 = vpop.f32.mrb[0].mxu0
        %493 = vdwg.mxu0
        %494 = vadd.xlane.f32.xlu0 %v486
        %v495 = vpop.xlane.xlu0 %494
        %496 = vadd.xlane.f32.xlu0 %v491
        %v497 = vpop.xlane.xlu0 %496
        %v498 = vmul.f32 %v495, 0.03125
        %v499 = vmul.f32 %v497, 0.03125
        %v500 = vsub.f32 %v486, %v498
        %v501 = vsub.f32 %v491, %v499
        %v502 = vld [vmem:[%s4 + $0x3] sm:$0x1]
        %v503 = vlaneseq
        %v504 = vshrl.u32 %v503, 7
        %v505 = vsub.s32 0, %v504
        %v506 = vrot.slane %v502, %v505
        %v507 = vmul.f32 %v500, %v506
        %v508 = vmul.f32 %v501, %v506
        %v509 = vmul.f32 %v507, %v507
        %v510 = vmul.f32 %v508, %v508
        %511 = vadd.xlane.f32.xlu0 %v509
        %v512 = vpop.xlane.xlu0 %511
        %513 = vadd.xlane.f32.xlu0 %v510
        %v514 = vpop.xlane.xlu0 %513
        %v515 = vmul.f32 %v512, 0.03125
        %v516 = vmul.f32 %v514, 0.03125
        %v517 = vadd.f32 %v515, 1e-05
        %v518 = vadd.f32 %v516, 1e-05
        %v519 = vrsqrt.pop %v517
        %v520 = vrsqrt.pop %v518
        %v521 = vmul.f32 %v507, %v519
        %v522 = vmul.f32 %v508, %v520
        %v523 = vld [vmem:[%s4 + $0x1] sm:$0x1]
        %v524 = vlaneseq
        %v525 = vshrl.u32 %v524, 7
        %v526 = vsub.s32 0, %v525
        %v527 = vrot.slane %v523, %v526
        %v528 = vmul.f32 %v521, %v527
        %v529 = vmul.f32 %v522, %v527
        %v530 = vld [vmem:[%s4 + $0x2] sm:$0x1]
        %v531 = vlaneseq
        %v532 = vshrl.u32 %v531, 7
        %v533 = vsub.s32 0, %v532
        %v534 = vrot.slane %v530, %v533
        %v535 = vadd.f32 %v528, %v534
        %v536 = vadd.f32 %v529, %v534
        %v537 = vmax.f32 %v535, 0.0
        %v538 = vmax.f32 %v536, 0.0
        %539 = vst [vmem:[%s285] sm:$0xff] %v537
        %540 = vst [vmem:[%s285 + $0x8] sm:$0xff] %v538
        %541 = vst.msk [vmem:[%s278] sm:$0xff] %vm412, %v537
        %542 = vst.msk [vmem:[%s278 + $0x8] sm:$0xff] %vm412, %v538
        %s543 = sand.u32 %s152, 1
        %s544 = scalar_lea.sflag [#allocation3], %s543
        %s545 = sand.u32 %s152, 1
        %s546 = smul.addr %s545, 16
        %s547 = scalar_lea.vmem [#allocation2], %s546
        %s548 = sand.u32 %s178, 1
        %s549 = scalar_lea.sflag [#allocation5], %s548
        %s550 = sand.u32 %s178, 1
        %s551 = smul.addr %s550, 16
        %s552 = scalar_lea.vmem [#allocation4], %s551
        // Predicated region
        $region41: #{identity_operation_forward.1} parent=39 // pred_check
          %p553 = pneg %p162
        $region42: #{identity_operation_forward.1} parent=39 // pred_check_branch
          %555 = sbr.rel (%p553) target = $region44
        $region43: #{identity_operation_forward.1} parent=39 // pred_region
          %s557 = ssub.s32 256, 256
          %558 = vsyncadd %s544, %s557
          %s559 = smul.addr %s24, 2
          %s560 = smul.addr %s559, 128
          %s561 = scalar_lea.hbm %s5, %s560
          %s562 = sshll.u32 %s547, 4
          %s563 = int_to_ptr.vmem [resolvable:$true] %s562
          %568 = dma.vmem_to_hbm [thread:$0]  %s563, 256, %s561, %s544, 128, 128, 8
        $region44: #{identity_operation_forward.1} parent=39 // pred_fallthru
          _
        // Predicated region
        $region45: #{identity_operation_forward.1} parent=39 // pred_check
          %p569 = pneg %p188
        $region46: #{identity_operation_forward.1} parent=39 // pred_check_branch
          %571 = sbr.rel (%p569) target = $region48
        $region47: #{identity_operation_forward.1} parent=39 // pred_region
          %s573 = ssub.s32 256, 256
          %574 = vsyncadd %s549, %s573
          %s575 = smul.addr %s24, 2
          %s576 = smul.addr %s575, 128
          %s577 = scalar_lea.hbm %s6, %s576
          %s578 = sshll.u32 %s552, 4
          %s579 = int_to_ptr.vmem [resolvable:$true] %s578
          %584 = dma.vmem_to_hbm [thread:$0]  %s579, 256, %s577, %s549, 128, 128, 8
        $region48: #{identity_operation_forward.1} parent=39 // pred_fallthru
          _
      $region40: #{identity_operation_forward.1} parent=5 // pred_fallthru
        _
      %p585 = scmp.le.s32.totalorder 2, %s19
      // Predicated region
      $region49: #{identity_operation_forward.1} parent=5 // pred_check
        %p586 = pneg %p585
      $region50: #{identity_operation_forward.1} parent=5 // pred_check_branch
        %588 = sbr.rel (%p586) target = $region52
      $region51: #{identity_operation_forward.1} parent=5 // pred_region
        %s589 = ssub.s32 %s19, 2
        // Predicated region
        $region53: #{identity_operation_forward.1} parent=51 // pred_check
          %p590 = pneg %p168
        $region54: #{identity_operation_forward.1} parent=51 // pred_check_branch
          %592 = sbr.rel (%p590) target = $region56
        $region55: #{identity_operation_forward.1} parent=51 // pred_region
          %s593 = sand.u32 %s153, 1
          %s594 = scalar_lea.sflag [#allocation3], %s593
          %s595 = sand.u32 %s153, 1
          %s596 = smul.addr %s595, 16
          %s597 = scalar_lea.vmem [#allocation2], %s596
          %598 = dma.done %s594, 256
        $region56: #{identity_operation_forward.1} parent=51 // pred_fallthru
          _
        // Predicated region
        $region57: #{identity_operation_forward.1} parent=51 // pred_check
          %p599 = pneg %p194
        $region58: #{identity_operation_forward.1} parent=51 // pred_check_branch
          %601 = sbr.rel (%p599) target = $region60
        $region59: #{identity_operation_forward.1} parent=51 // pred_region
          %s602 = sand.u32 %s179, 1
          %s603 = scalar_lea.sflag [#allocation5], %s602
          %s604 = sand.u32 %s179, 1
          %s605 = smul.addr %s604, 16
          %s606 = scalar_lea.vmem [#allocation4], %s605
          %607 = dma.done %s603, 256
        $region60: #{identity_operation_forward.1} parent=51 // pred_fallthru
          _
      $region52: #{identity_operation_forward.1} parent=5 // pred_fallthru
        _
    $region6: #{identity_operation_forward.1} parent=1 // loop_footer
      %s23 = sadd.s32 1, %s19
    $region7: #{identity_operation_forward.1} parent=1 // loop_footer_branch
      %18 = sbr.rel target = $region3
    $region8: #{identity_operation_forward.1} parent=1 // loop_exit
      _
    %608 = vsyncpa [#allocation3], 1
    %s609 = scalar_lea.sflag [#allocation3], 1
    %610 = vsyncpa %s609, 1
    %611 = vsyncpa [#allocation5], 1
    %s612 = scalar_lea.sflag [#allocation5], 1
    %613 = vsyncpa %s612, 1

</llo_original>
